<compile_context>
chip_gen: v5e
topology: v5e:2x2
jax: 0.10.0
libtpu: 0.0.40
codegen_flags: <defaults>
</compile_context>

<pallas_src>
import math
from functools import partial

import jax
import jax.numpy as jnp
from jax import lax
from jax.experimental import pallas as pl
from jax.experimental.pallas import tpu as pltpu

LANE = 128


# ---------------------------------------------------------------------------
# route_args (pure Python glue, identical semantics to the PyTorch helper)
# ---------------------------------------------------------------------------
def route_args(router, args, depth):
    routed_args = [(dict(), dict()) for _ in range(depth)]
    matched_keys = [key for key in args.keys() if key in router]
    for key in matched_keys:
        val = args[key]
        for d, ((f_args, g_args), routes) in enumerate(zip(routed_args, router[key])):
            new_f_args, new_g_args = map(
                lambda route: {key: val} if route else {}, routes)
            routed_args[d] = ({**f_args, **new_f_args}, {**g_args, **new_g_args})
    return routed_args


# ---------------------------------------------------------------------------
# Padding helpers (construction-time only; free)
# ---------------------------------------------------------------------------
def _round_up(v, m):
    return (v + m - 1) // m * m


def _pad_to(a, shape):
    pads = [(0, t - s) for s, t in zip(a.shape, shape)]
    if any(p[1] for p in pads):
        a = jnp.pad(a, pads)
    return a


def _mm(a, b):
    """Mixed-precision matmul: bf16 operands, f32 accumulation (MXU native)."""
    return jnp.dot(a.astype(jnp.bfloat16), b.astype(jnp.bfloat16),
                   preferred_element_type=jnp.float32)


# ---------------------------------------------------------------------------
# Fused Pallas kernel: grid = (batch, depth); x resident in a VMEM scratch
# ---------------------------------------------------------------------------
def _stack_kernel(x_ref, wqkv_ref, wo_ref, w1_ref, b1_ref, w2_ref, b2_ref,
                  o_ref, acc_ref, *, d_model, d_pad):
    layer = pl.program_id(1)

    # First layer of each batch: load x into the lane-padded f32 accumulator.
    # Padding is exact: padded rows/cols of every weight (and bias lanes) are
    # zero, so padded activation lanes stay identically zero end-to-end.
    @pl.when(layer == 0)
    def _():
        acc_ref[...] = jnp.zeros_like(acc_ref)
        acc_ref[:, :d_model] = x_ref[...].astype(jnp.float32)

    x = acc_ref[...]                                        # (N, Dp) f32

    # ---- f(x): single-head self-attention (1/sqrt(D) pre-folded into Wq) ---
    qkv = _mm(x, wqkv_ref[...])                             # (N, 3*Dp) f32
    q = qkv[:, :d_pad]
    k = qkv[:, d_pad:2 * d_pad]
    v = qkv[:, 2 * d_pad:]

    # q @ k.T via dot_general contracting last axes (no XLU transpose).
    s = lax.dot_general(q.astype(jnp.bfloat16), k.astype(jnp.bfloat16),
                        (((1,), (1,)), ((), ())),
                        preferred_element_type=jnp.float32)  # (N, N)
    # TODO(synk): for long sequences, tile keys in 128-wide blocks with online
    # (flash) softmax instead of materializing the full (N, N) score block.
    s = s - jnp.max(s, axis=-1, keepdims=True)
    p = jnp.exp(s)
    p = p / jnp.sum(p, axis=-1, keepdims=True)              # exact divide

    a = _mm(p, v)                                           # (N, Dp)
    x = x + _mm(a, wo_ref[...])                             # residual

    # ---- g(x): feed-forward, tanh GELU (EUP tanh co-issues with MXU work) --
    h = _mm(x, w1_ref[...]) + b1_ref[...]
    h = jax.nn.gelu(h, approximate=True)
    x = x + _mm(h, w2_ref[...]) + b2_ref[...]

    acc_ref[...] = x                                        # carry to next layer

    @pl.when(layer == pl.num_programs(1) - 1)
    def _():
        o_ref[...] = x[:, :d_model].astype(o_ref.dtype)


@jax.jit
def transformer_stack(x, wqkv, wo, w1, b1, w2, b2):
    """x: (B, N, D) f32 (unpadded). Weights depth-stacked, lane-padded, bf16
    (biases f32)."""
    B, N, D = x.shape
    depth, d_pad, three_dp = wqkv.shape
    h_pad = w1.shape[-1]

    return pl.pallas_call(
        partial(_stack_kernel, d_model=D, d_pad=d_pad),
        out_shape=jax.ShapeDtypeStruct((B, N, D), x.dtype),
        grid=(B, depth),
        in_specs=[
            # activations: per-batch block, constant across the depth axis
            pl.BlockSpec((None, N, D), lambda b, l: (b, 0, 0)),
            # per-layer weights: indexed by the depth axis -> DMA pipelined
            pl.BlockSpec((None, d_pad, three_dp), lambda b, l: (l, 0, 0)),
            pl.BlockSpec((None, d_pad, d_pad), lambda b, l: (l, 0, 0)),
            pl.BlockSpec((None, d_pad, h_pad), lambda b, l: (l, 0, 0)),
            pl.BlockSpec((None, 1, h_pad), lambda b, l: (l, 0, 0)),
            pl.BlockSpec((None, h_pad, d_pad), lambda b, l: (l, 0, 0)),
            pl.BlockSpec((None, 1, d_pad), lambda b, l: (l, 0, 0)),
        ],
        out_specs=pl.BlockSpec((None, N, D), lambda b, l: (b, 0, 0)),
        scratch_shapes=[pltpu.VMEM((N, d_pad), jnp.float32)],
        # Well under default scoped VMEM even on v7x (~2 layers of bf16
        # weights double-buffered + one activation tile) -> no limit raise.
        compiler_params=pltpu.CompilerParams(
            dimension_semantics=("parallel", "arbitrary")),
    )(x, wqkv, wo, w1, b1, w2, b2)


# ---------------------------------------------------------------------------
# SequentialSequence in JAX (fused hot path)
# ---------------------------------------------------------------------------
class SequentialSequence:
    """layer_params: list of ((wq, wk, wv, wo), (w1, b1, w2, b2)) per layer."""

    def __init__(self, layer_params, args_route=None):
        args_route = args_route or {}
        assert all(len(route) == len(layer_params) for route in args_route.values()), \
            "each argument route map must have the same depth as the number of layers"
        self.args_route = args_route
        self.depth = len(layer_params)
        self.d_model = layer_params[0][0][0].shape[0]
        h_dim = layer_params[0][1][0].shape[1]
        d_pad = _round_up(self.d_model, LANE)
        h_pad = _round_up(h_dim, LANE)
        scale = 1.0 / math.sqrt(self.d_model)

        wqkv, wo, w1, b1, w2, b2 = [], [], [], [], [], []
        for (lwq, lwk, lwv, lwo), (lw1, lb1, lw2, lb2) in layer_params:
            # Fold attention scale into Wq (in f32) before the bf16 cast.
            wqkv.append(jnp.concatenate(
                [_pad_to(lwq * scale, (d_pad, d_pad)),
                 _pad_to(lwk, (d_pad, d_pad)),
                 _pad_to(lwv, (d_pad, d_pad))], axis=1).astype(jnp.bfloat16))
            wo.append(_pad_to(lwo, (d_pad, d_pad)).astype(jnp.bfloat16))
            w1.append(_pad_to(lw1, (d_pad, h_pad)).astype(jnp.bfloat16))
            b1.append(_pad_to(lb1, (1, h_pad)))            # biases stay f32
            w2.append(_pad_to(lw2, (h_pad, d_pad)).astype(jnp.bfloat16))
            b2.append(_pad_to(lb2, (1, d_pad)))

        self.wqkv = jnp.stack(wqkv)
        self.wo = jnp.stack(wo)
        self.w1 = jnp.stack(w1)
        self.b1 = jnp.stack(b1)
        self.w2 = jnp.stack(w2)
        self.b2 = jnp.stack(b2)

    def __call__(self, x, **kwargs):
        # route_args kept for API parity; this attention/FF instantiation
        # takes no routed kwargs, so the routed dicts are unused.
        _ = route_args(self.args_route, kwargs, self.depth)
        return transformer_stack(x, self.wqkv, self.wo,
                                 self.w1, self.b1, self.w2, self.b2)


# ---------------------------------------------------------------------------
# Reference (plain JAX) mirroring the kernel's mixed-precision policy:
# bf16 matmul operands / f32 accumulation, f32 softmax/GELU/residual,
# 1/sqrt(D) folded into the Q projection, tanh GELU.  This makes the check
# backend-agnostic and tight; a pure-f32 reference differs only by ~bf16
# rounding noise (<~5e-2 abs at these shapes).
# ---------------------------------------------------------------------------
def ref_forward(x, params):
    D = x.shape[-1]
    scale = 1.0 / math.sqrt(D)

    def mm(a, b):
        return jnp.dot(a.astype(jnp.bfloat16), b.astype(jnp.bfloat16),
                       preferred_element_type=jnp.float32)

    for (wq, wk, wv, wo), (w1, b1, w2, b2) in params:
        q = mm(x, wq * scale)
        k = mm(x, wk)
        v = mm(x, wv)
        s = jnp.einsum("bnd,bmd->bnm", q.astype(jnp.bfloat16),
                       k.astype(jnp.bfloat16),
                       preferred_element_type=jnp.float32)
        s = s - jnp.max(s, axis=-1, keepdims=True)
        p = jnp.exp(s)
        p = p / jnp.sum(p, axis=-1, keepdims=True)
        a = jnp.einsum("bnm,bmd->bnd", p.astype(jnp.bfloat16),
                       v.astype(jnp.bfloat16),
                       preferred_element_type=jnp.float32)
        x = x + mm(a, wo)
        h = jax.nn.gelu(mm(x, w1) + b1, approximate=True)
        x = x + mm(h, w2) + b2
    return x


# ---------------------------------------------------------------------------
# Main
# ---------------------------------------------------------------------------
if __name__ == "__main__":
    B, N, D, H = 2, 8, 32, 64
    DEPTH = 2

    key = jax.random.PRNGKey(0)
    keys = jax.random.split(key, 1 + DEPTH * 8)
    x = jax.random.normal(keys[0], (B, N, D), dtype=jnp.float32)

    params = []
    ki = 1
    for _ in range(DEPTH):
        wq = jax.random.normal(keys[ki + 0], (D, D), jnp.float32) * (1.0 / math.sqrt(D))
        wk = jax.random.normal(keys[ki + 1], (D, D), jnp.float32) * (1.0 / math.sqrt(D))
        wv = jax.random.normal(keys[ki + 2], (D, D), jnp.float32) * (1.0 / math.sqrt(D))
        wo = jax.random.normal(keys[ki + 3], (D, D), jnp.float32) * (1.0 / math.sqrt(D))
        w1 = jax.random.normal(keys[ki + 4], (D, H), jnp.float32) * (1.0 / math.sqrt(D))
        b1 = jax.random.normal(keys[ki + 5], (1, H), jnp.float32) * 0.01
        w2 = jax.random.normal(keys[ki + 6], (H, D), jnp.float32) * (1.0 / math.sqrt(H))
        b2 = jax.random.normal(keys[ki + 7], (1, D), jnp.float32) * 0.01
        ki += 8
        params.append(((wq, wk, wv, wo), (w1, b1, w2, b2)))

    model = SequentialSequence(params, args_route={})
    out = jax.block_until_ready(model(x))

    ref = ref_forward(x, params)
    assert out.shape == (B, N, D)
    # Kernel and reference share the same quantization points (bf16 operands,
    # f32 accumulation), so the remaining difference is accumulation-order /
    # transcendental ULP noise (~1e-5): 2e-3 gives >100x margin.
    assert jnp.allclose(out, ref, atol=2e-3, rtol=2e-3), "mismatch vs JAX reference"

    print("KERNEL_OK")
</pallas_src>

<mosaic_0001>
module attributes {stable_mosaic.version = 11 : i64} {
  func.func @_stack_kernel(%arg0: i32, %arg1: i32, %arg2: memref<1x8x32xf32, #tpu.memory_space<vmem>>, %arg3: memref<1x128x384xbf16, #tpu.memory_space<vmem>>, %arg4: memref<1x128x128xbf16, #tpu.memory_space<vmem>>, %arg5: memref<1x128x128xbf16, #tpu.memory_space<vmem>>, %arg6: memref<1x1x128xf32, #tpu.memory_space<vmem>>, %arg7: memref<1x128x128xbf16, #tpu.memory_space<vmem>>, %arg8: memref<1x1x128xf32, #tpu.memory_space<vmem>>, %arg9: memref<1x8x32xf32, #tpu.memory_space<vmem>>, %arg10: memref<8x128xf32, #tpu.memory_space<vmem>>) attributes {dimension_semantics = [#tpu.dimension_semantics<parallel>, #tpu.dimension_semantics<arbitrary>], iteration_bounds = array<i64: 2, 2>, scalar_prefetch = 0 : i64, scratch_operands = 1 : i64, tpu.core_type = #tpu.core_type<tc>, window_params = [{transform_indices = @transform_0, window_bounds = array<i64: 1, 8, 32>}, {transform_indices = @transform_1, window_bounds = array<i64: 1, 128, 384>}, {transform_indices = @transform_2, window_bounds = array<i64: 1, 128, 128>}, {transform_indices = @transform_3, window_bounds = array<i64: 1, 128, 128>}, {transform_indices = @transform_4, window_bounds = array<i64: 1, 1, 128>}, {transform_indices = @transform_5, window_bounds = array<i64: 1, 128, 128>}, {transform_indices = @transform_6, window_bounds = array<i64: 1, 1, 128>}, {transform_indices = @transform_7, window_bounds = array<i64: 1, 8, 32>}]} {
    %c0_i32 = arith.constant 0 : i32
    %0 = arith.cmpi eq, %arg1, %c0_i32 : i32
    %1 = arith.extui %0 : i1 to i32
    %c0_i32_0 = arith.constant 0 : i32
    %2 = arith.cmpi ne, %1, %c0_i32_0 : i32
    scf.if %2 {
      %cst_34 = arith.constant 0.000000e+00 : f32
      %65 = vector.broadcast %cst_34 : f32 to vector<8x128xf32>
      %c0_35 = arith.constant 0 : index
      %c0_36 = arith.constant 0 : index
      %66 = vector.load %arg10[%c0_35, %c0_36] : memref<8x128xf32, #tpu.memory_space<vmem>>, vector<8x128xf32>
      tpu.vector_store %arg10[%c0_35, %c0_36], %65 {strides = array<i32>} : memref<8x128xf32, #tpu.memory_space<vmem>>, vector<8x128xf32>,
      %c0_37 = arith.constant 0 : index
      %c0_38 = arith.constant 0 : index
      %c0_39 = arith.constant 0 : index
      %67 = vector.load %arg2[%c0_37, %c0_38, %c0_39] : memref<1x8x32xf32, #tpu.memory_space<vmem>>, vector<1x8x32xf32>
      %68 = vector.shape_cast %67 : vector<1x8x32xf32> to vector<8x32xf32>
      %c0_40 = arith.constant 0 : index
      %c0_41 = arith.constant 0 : index
      %69 = vector.load %arg10[%c0_40, %c0_41] : memref<8x128xf32, #tpu.memory_space<vmem>>, vector<8x32xf32>
      tpu.vector_store %arg10[%c0_40, %c0_41], %68 {strides = array<i32>} : memref<8x128xf32, #tpu.memory_space<vmem>>, vector<8x32xf32>,
    } else {
    }
    %c0 = arith.constant 0 : index
    %c0_1 = arith.constant 0 : index
    %3 = vector.load %arg10[%c0, %c0_1] : memref<8x128xf32, #tpu.memory_space<vmem>>, vector<8x128xf32>
    %c0_2 = arith.constant 0 : index
    %c0_3 = arith.constant 0 : index
    %c0_4 = arith.constant 0 : index
    %4 = vector.load %arg3[%c0_2, %c0_3, %c0_4] : memref<1x128x384xbf16, #tpu.memory_space<vmem>>, vector<1x128x384xbf16>
    %5 = vector.shape_cast %4 : vector<1x128x384xbf16> to vector<128x384xbf16>
    %6 = arith.truncf %3 : vector<8x128xf32> to vector<8x128xbf16>
    %cst = arith.constant dense<0.000000e+00> : vector<8x384xf32>
    %7 = tpu.matmul %6, %5, %cst {dimension_numbers = #tpu.dot_dimension_numbers<[1], [0], [0], [1], [0, 0, 1, 1], [], []>} : vector<8x128xbf16>, vector<128x384xbf16>, vector<8x384xf32> -> vector<8x384xf32>
    %8 = vector.extract_strided_slice %7 {offsets = [0, 0], sizes = [8, 128], strides = [1, 1]} : vector<8x384xf32> to vector<8x128xf32>
    %9 = vector.extract_strided_slice %7 {offsets = [0, 128], sizes = [8, 128], strides = [1, 1]} : vector<8x384xf32> to vector<8x128xf32>
    %10 = vector.extract_strided_slice %7 {offsets = [0, 256], sizes = [8, 128], strides = [1, 1]} : vector<8x384xf32> to vector<8x128xf32>
    %11 = arith.truncf %8 : vector<8x128xf32> to vector<8x128xbf16>
    %12 = arith.truncf %9 : vector<8x128xf32> to vector<8x128xbf16>
    %cst_5 = arith.constant dense<0.000000e+00> : vector<8x8xf32>
    %13 = tpu.matmul %11, %12, %cst_5 {dimension_numbers = #tpu.dot_dimension_numbers<[1], [1], [0], [0], [0, 0, 1, 0], [], []>} : vector<8x128xbf16>, vector<8x128xbf16>, vector<8x8xf32> -> vector<8x8xf32>
    %cst_6 = arith.constant dense<0xFF800000> : vector<8xf32>
    %14 = vector.multi_reduction <maximumf>, %13, %cst_6 [1] : vector<8x8xf32> to vector<8xf32>
    %15 = vector.shape_cast %14 : vector<8xf32> to vector<8x1xf32>
    %16 = vector.broadcast %15 : vector<8x1xf32> to vector<8x8xf32>
    %17 = arith.subf %13, %16 : vector<8x8xf32>
    %18 = math.exp %17 : vector<8x8xf32>
    %cst_7 = arith.constant dense<0.000000e+00> : vector<8xf32>
    %19 = vector.multi_reduction <add>, %18, %cst_7 [1] : vector<8x8xf32> to vector<8xf32>
    %20 = vector.shape_cast %19 : vector<8xf32> to vector<8x1xf32>
    %21 = vector.broadcast %20 : vector<8x1xf32> to vector<8x8xf32>
    %22 = arith.divf %18, %21 : vector<8x8xf32>
    %23 = arith.truncf %22 : vector<8x8xf32> to vector<8x8xbf16>
    %24 = arith.truncf %10 : vector<8x128xf32> to vector<8x128xbf16>
    %cst_8 = arith.constant dense<0.000000e+00> : vector<8x128xf32>
    %25 = tpu.matmul %23, %24, %cst_8 {dimension_numbers = #tpu.dot_dimension_numbers<[1], [0], [0], [1], [0, 0, 1, 1], [], []>} : vector<8x8xbf16>, vector<8x128xbf16>, vector<8x128xf32> -> vector<8x128xf32>
    %c0_9 = arith.constant 0 : index
    %c0_10 = arith.constant 0 : index
    %c0_11 = arith.constant 0 : index
    %26 = vector.load %arg4[%c0_9, %c0_10, %c0_11] : memref<1x128x128xbf16, #tpu.memory_space<vmem>>, vector<1x128x128xbf16>
    %27 = vector.shape_cast %26 : vector<1x128x128xbf16> to vector<128x128xbf16>
    %28 = arith.truncf %25 : vector<8x128xf32> to vector<8x128xbf16>
    %cst_12 = arith.constant dense<0.000000e+00> : vector<8x128xf32>
    %29 = tpu.matmul %28, %27, %cst_12 {dimension_numbers = #tpu.dot_dimension_numbers<[1], [0], [0], [1], [0, 0, 1, 1], [], []>} : vector<8x128xbf16>, vector<128x128xbf16>, vector<8x128xf32> -> vector<8x128xf32>
    %30 = arith.addf %3, %29 : vector<8x128xf32>
    %c0_13 = arith.constant 0 : index
    %c0_14 = arith.constant 0 : index
    %c0_15 = arith.constant 0 : index
    %31 = vector.load %arg5[%c0_13, %c0_14, %c0_15] : memref<1x128x128xbf16, #tpu.memory_space<vmem>>, vector<1x128x128xbf16>
    %32 = vector.shape_cast %31 : vector<1x128x128xbf16> to vector<128x128xbf16>
    %33 = arith.truncf %30 : vector<8x128xf32> to vector<8x128xbf16>
    %cst_16 = arith.constant dense<0.000000e+00> : vector<8x128xf32>
    %34 = tpu.matmul %33, %32, %cst_16 {dimension_numbers = #tpu.dot_dimension_numbers<[1], [0], [0], [1], [0, 0, 1, 1], [], []>} : vector<8x128xbf16>, vector<128x128xbf16>, vector<8x128xf32> -> vector<8x128xf32>
    %c0_17 = arith.constant 0 : index
    %c0_18 = arith.constant 0 : index
    %c0_19 = arith.constant 0 : index
    %35 = vector.load %arg6[%c0_17, %c0_18, %c0_19] : memref<1x1x128xf32, #tpu.memory_space<vmem>>, vector<1x1x128xf32>
    %36 = vector.shape_cast %35 : vector<1x1x128xf32> to vector<1x128xf32>
    %37 = vector.broadcast %36 : vector<1x128xf32> to vector<8x128xf32>
    %38 = arith.addf %34, %37 : vector<8x128xf32>
    %39 = arith.mulf %38, %38 : vector<8x128xf32>
    %40 = arith.mulf %38, %39 : vector<8x128xf32>
    %cst_20 = arith.constant 4.471500e-02 : f32
    %41 = vector.broadcast %cst_20 : f32 to vector<8x128xf32>
    %42 = arith.mulf %41, %40 : vector<8x128xf32>
    %43 = arith.addf %38, %42 : vector<8x128xf32>
    %cst_21 = arith.constant 0.797884583 : f32
    %44 = vector.broadcast %cst_21 : f32 to vector<8x128xf32>
    %45 = arith.mulf %44, %43 : vector<8x128xf32>
    %46 = math.tanh %45 : vector<8x128xf32>
    %cst_22 = arith.constant 1.000000e+00 : f32
    %47 = vector.broadcast %cst_22 : f32 to vector<8x128xf32>
    %48 = arith.addf %47, %46 : vector<8x128xf32>
    %cst_23 = arith.constant 5.000000e-01 : f32
    %49 = vector.broadcast %cst_23 : f32 to vector<8x128xf32>
    %50 = arith.mulf %49, %48 : vector<8x128xf32>
    %51 = arith.mulf %38, %50 : vector<8x128xf32>
    %c0_24 = arith.constant 0 : index
    %c0_25 = arith.constant 0 : index
    %c0_26 = arith.constant 0 : index
    %52 = vector.load %arg7[%c0_24, %c0_25, %c0_26] : memref<1x128x128xbf16, #tpu.memory_space<vmem>>, vector<1x128x128xbf16>
    %53 = vector.shape_cast %52 : vector<1x128x128xbf16> to vector<128x128xbf16>
    %54 = arith.truncf %51 : vector<8x128xf32> to vector<8x128xbf16>
    %cst_27 = arith.constant dense<0.000000e+00> : vector<8x128xf32>
    %55 = tpu.matmul %54, %53, %cst_27 {dimension_numbers = #tpu.dot_dimension_numbers<[1], [0], [0], [1], [0, 0, 1, 1], [], []>} : vector<8x128xbf16>, vector<128x128xbf16>, vector<8x128xf32> -> vector<8x128xf32>
    %56 = arith.addf %30, %55 : vector<8x128xf32>
    %c0_28 = arith.constant 0 : index
    %c0_29 = arith.constant 0 : index
    %c0_30 = arith.constant 0 : index
    %57 = vector.load %arg8[%c0_28, %c0_29, %c0_30] : memref<1x1x128xf32, #tpu.memory_space<vmem>>, vector<1x1x128xf32>
    %58 = vector.shape_cast %57 : vector<1x1x128xf32> to vector<1x128xf32>
    %59 = vector.broadcast %58 : vector<1x128xf32> to vector<8x128xf32>
    %60 = arith.addf %56, %59 : vector<8x128xf32>
    %c0_31 = arith.constant 0 : index
    %c0_32 = arith.constant 0 : index
    %61 = vector.load %arg10[%c0_31, %c0_32] : memref<8x128xf32, #tpu.memory_space<vmem>>, vector<8x128xf32>
    tpu.vector_store %arg10[%c0_31, %c0_32], %60 {strides = array<i32>} : memref<8x128xf32, #tpu.memory_space<vmem>>, vector<8x128xf32>,
    %c1_i32 = arith.constant 1 : i32
    %62 = arith.cmpi eq, %arg1, %c1_i32 : i32
    %63 = arith.extui %62 : i1 to i32
    %c0_i32_33 = arith.constant 0 : i32
    %64 = arith.cmpi ne, %63, %c0_i32_33 : i32
    scf.if %64 {
      %65 = vector.extract_strided_slice %60 {offsets = [0, 0], sizes = [8, 32], strides = [1, 1]} : vector<8x128xf32> to vector<8x32xf32>
      %c0_34 = arith.constant 0 : index
      %c0_35 = arith.constant 0 : index
      %c0_36 = arith.constant 0 : index
      %66 = vector.load %arg9[%c0_34, %c0_35, %c0_36] : memref<1x8x32xf32, #tpu.memory_space<vmem>>, vector<1x8x32xf32>
      %67 = vector.shape_cast %66 : vector<1x8x32xf32> to vector<8x32xf32>
      %68 = vector.shape_cast %65 : vector<8x32xf32> to vector<1x8x32xf32>
      tpu.vector_store %arg9[%c0_34, %c0_35, %c0_36], %68 {strides = array<i32>} : memref<1x8x32xf32, #tpu.memory_space<vmem>>, vector<1x8x32xf32>,
    } else {
    }
    return
  }
  func.func @transform_0(%arg0: i32, %arg1: i32) -> (i32, i32, i32) {
    %c0_i32 = arith.constant 0 : i32
    %c0_i32_0 = arith.constant 0 : i32
    %c0_i32_1 = arith.constant 0 : i32
    return %arg0, %c0_i32, %c0_i32_0 : i32, i32, i32
  }
  func.func @transform_1(%arg0: i32, %arg1: i32) -> (i32, i32, i32) {
    %c0_i32 = arith.constant 0 : i32
    %c0_i32_0 = arith.constant 0 : i32
    %c0_i32_1 = arith.constant 0 : i32
    return %arg1, %c0_i32, %c0_i32_0 : i32, i32, i32
  }
  func.func @transform_2(%arg0: i32, %arg1: i32) -> (i32, i32, i32) {
    %c0_i32 = arith.constant 0 : i32
    %c0_i32_0 = arith.constant 0 : i32
    %c0_i32_1 = arith.constant 0 : i32
    return %arg1, %c0_i32, %c0_i32_0 : i32, i32, i32
  }
  func.func @transform_3(%arg0: i32, %arg1: i32) -> (i32, i32, i32) {
    %c0_i32 = arith.constant 0 : i32
    %c0_i32_0 = arith.constant 0 : i32
    %c0_i32_1 = arith.constant 0 : i32
    return %arg1, %c0_i32, %c0_i32_0 : i32, i32, i32
  }
  func.func @transform_4(%arg0: i32, %arg1: i32) -> (i32, i32, i32) {
    %c0_i32 = arith.constant 0 : i32
    %c0_i32_0 = arith.constant 0 : i32
    %c0_i32_1 = arith.constant 0 : i32
    return %arg1, %c0_i32, %c0_i32_0 : i32, i32, i32
  }
  func.func @transform_5(%arg0: i32, %arg1: i32) -> (i32, i32, i32) {
    %c0_i32 = arith.constant 0 : i32
    %c0_i32_0 = arith.constant 0 : i32
    %c0_i32_1 = arith.constant 0 : i32
    return %arg1, %c0_i32, %c0_i32_0 : i32, i32, i32
  }
  func.func @transform_6(%arg0: i32, %arg1: i32) -> (i32, i32, i32) {
    %c0_i32 = arith.constant 0 : i32
    %c0_i32_0 = arith.constant 0 : i32
    %c0_i32_1 = arith.constant 0 : i32
    return %arg1, %c0_i32, %c0_i32_0 : i32, i32, i32
  }
  func.func @transform_7(%arg0: i32, %arg1: i32) -> (i32, i32, i32) {
    %c0_i32 = arith.constant 0 : i32
    %c0_i32_0 = arith.constant 0 : i32
    %c0_i32_1 = arith.constant 0 : i32
    return %arg0, %c0_i32, %c0_i32_0 : i32, i32, i32
  }
}

</mosaic_0001>

<llo_original>
// kernel: transformer_stack.1
$region0: #{transformer_stack.1}
  #allocation0 [shape = 'u32[]', space=smem, size = 0x4, offset = 0x4, fixed_abs, tag = 'smem constant byte address 0x4 - core index']
  #allocation1 [shape = 'u32[72,128]{1,0:T(1,128)}', space=vmem, size = 0x9000, scoped, tag = 'internal scratch']
  #allocation2 [shape = 'f32[8,128]{1,0:T(8,128)}', space=vmem, size = 0x1000, scoped, tag = 'scratch operand']
  %s0 = inlined_call_operand.hbm [shape: f32[2,8,32], index: 0, kind: input, shape index: {}]
  %s1 = inlined_call_operand.hbm [shape: bf16[2,128,384], index: 1, kind: input, shape index: {}]
  %s2 = inlined_call_operand.hbm [shape: bf16[2,128,128], index: 2, kind: input, shape index: {}]
  %s3 = inlined_call_operand.hbm [shape: bf16[2,128,128], index: 3, kind: input, shape index: {}]
  %s4 = inlined_call_operand.vmem [shape: f32[2,1,128], index: 4, kind: input, shape index: {}]
  %s5 = inlined_call_operand.hbm [shape: bf16[2,128,128], index: 5, kind: input, shape index: {}]
  %s6 = inlined_call_operand.vmem [shape: f32[2,1,128], index: 6, kind: input, shape index: {}]
  %s7 = inlined_call_operand.hbm [shape: f32[2,8,32], index: 7, kind: output, shape index: {}]
  %s8 = sld [smem:[#allocation0]]
  $region89: #{transformer_stack.1} parent=0
    _
  %s10 = ssub.s32 1, %s8
  %s11 = scalar_select 0, %s10, %s8
  $region1: #{transformer_stack.1} parent=0
    #allocation3 [shape = 'u8[8192]{0}', space=vmem, size = 0x2000, scoped, tag = 'input window, operand 0']
    #allocation4 [shape = 's32[2]{0}', space=sflag, size = 0x8, scoped, tag = 'scoped memory for transformer_stack.1']
    #allocation5 [shape = 's32[2]{0}', space=sflag, size = 0x8, scoped, tag = 'scoped memory for transformer_stack.1']
    #allocation6 [shape = 'u8[196608]{0}', space=vmem, size = 0x30000, scoped, tag = 'input window, operand 1']
    #allocation7 [shape = 's32[2]{0}', space=sflag, size = 0x8, scoped, tag = 'scoped memory for transformer_stack.1']
    #allocation8 [shape = 'u8[65536]{0}', space=vmem, size = 0x10000, scoped, tag = 'input window, operand 2']
    #allocation9 [shape = 'u8[65536]{0}', space=vmem, size = 0x10000, scoped, tag = 'input window, operand 3']
    #allocation10 [shape = 's32[2]{0}', space=sflag, size = 0x8, scoped, tag = 'scoped memory for transformer_stack.1']
    #allocation11 [shape = 'u8[65536]{0}', space=vmem, size = 0x10000, scoped, tag = 'input window, operand 5']
    #allocation12 [shape = 'u8[8192]{0}', space=vmem, size = 0x2000, scoped, tag = 'output window, operand 0']
    %12 = vsyncpa [#allocation4], 0
    %s13 = scalar_lea.sflag [#allocation4], 1
    %14 = vsyncpa %s13, 0
    %15 = vsyncpa [#allocation7], 0
    %s16 = scalar_lea.sflag [#allocation7], 1
    %17 = vsyncpa %s16, 0
    %18 = vsyncpa [#allocation10], 0
    %s19 = scalar_lea.sflag [#allocation10], 1
    %20 = vsyncpa %s19, 0
    %21 = vsyncpa [#allocation5], 0
    %s22 = scalar_lea.sflag [#allocation5], 1
    %23 = vsyncpa %s22, 0
    loop: start=0, step=1, limit=6
    $region2: #{transformer_stack.1} parent=1 // loop_pre_header
      _
    $region3: #{transformer_stack.1} parent=1 // loop_header
      %s25 = sphi 0, %s29
      %p26 = scmp.ge.s32.totalorder %s25, 6
      %s32 = sphi 0, %s44
      %s33 = sphi 0, %s40
      %s34 = sphi 0, %s32
      %s35 = sphi 0, %s33
      %s36 = sphi 0, %s34
      %s37 = sphi 0, %s35
      %s47 = sphi 0, %s49
      %s50 = sphi 0, %s47
      %s51 = sphi 0, %s50
      %s67 = sphi 0, %s51
      %s73 = sphi 0, %s75
      %s76 = sphi 0, %s73
      %s77 = sphi 0, %s76
      %s93 = sphi 0, %s77
      %s99 = sphi 0, %s101
      %s102 = sphi 0, %s99
      %s103 = sphi 0, %s102
      %s119 = sphi 0, %s103
      %s125 = sphi 0, %s127
      %s128 = sphi 0, %s125
      %s129 = sphi 0, %s128
      %s145 = sphi 0, %s129
      %s151 = sphi 0, %s153
      %s154 = sphi 0, %s151
      %s155 = sphi 0, %s154
      %s171 = sphi 0, %s155
      %s177 = sphi 0, %s179
      %s180 = sphi 0, %s177
      %s181 = sphi 0, %s180
      %s197 = sphi 0, %s181
      %s203 = sphi 0, %s205
      %s206 = sphi 0, %s203
      %s207 = sphi 0, %s206
      %s223 = sphi 0, %s207
      %s229 = sphi 0, %s231
      %s232 = sphi 0, %s229
      %s233 = sphi 0, %s232
      %s249 = sphi 0, %s233
    $region4: #{transformer_stack.1} parent=1 // loop_header_branch
      %28 = sbr.rel (%p26) target = $region8
    $region5: #{transformer_stack.1} parent=1 // loop_body
      %s30 = ssub.s32 %s25, 1
      %s31 = ssub.s32 %s25, 2
      %s38 = sadd.s32 1, %s33
      %p39 = scmp.ge.s32.totalorder %s38, 2
      %s40 = scalar_select %p39, 0, %s38
      %s41 = sadd.s32 1, %s32
      %s42 = scalar_select %p39, %s41, %s32
      %p43 = scmp.ge.s32.totalorder %s42, 2
      %s44 = scalar_select %p43, 0, %s42
      %s45 = ssub.s32 %s32, %s44
      %p46 = scmp.eq.s32.totalorder %s45, 0
      %s48 = sadd.s32 %s47, 1
      %s49 = scalar_select %p46, %s47, %s48
      %p52 = pneg %p46
      %p53 = scmp.eq.s32.totalorder %s25, 3
      %p54 = por %p52, %p53
      %p55 = scmp.ne.s32.totalorder %s47, %s50
      %p56 = scmp.eq.s32.totalorder %s25, 0
      %p57 = por %p55, %p56
      %p58 = scmp.ne.s32.totalorder %s47, %s50
      %p59 = scmp.eq.s32.totalorder %s30, 3
      %p60 = por %p58, %p59
      %p61 = scmp.ne.s32.totalorder %s50, %s51
      %p62 = scmp.eq.s32.totalorder %s30, 0
      %p63 = por %p61, %p62
      %p64 = scmp.ne.s32.totalorder %s50, %s51
      %p65 = scmp.eq.s32.totalorder %s31, 3
      %p66 = por %p64, %p65
      %p68 = scmp.ne.s32.totalorder %s51, %s67
      %p69 = scmp.eq.s32.totalorder %s31, 0
      %p70 = por %p68, %p69
      %s71 = ssub.s32 %s33, %s40
      %p72 = scmp.eq.s32.totalorder %s71, 0
      %s74 = sadd.s32 %s73, 1
      %s75 = scalar_select %p72, %s73, %s74
      %p78 = pneg %p72
      %p79 = scmp.eq.s32.totalorder %s25, 3
      %p80 = por %p78, %p79
      %p81 = scmp.ne.s32.totalorder %s73, %s76
      %p82 = scmp.eq.s32.totalorder %s25, 0
      %p83 = por %p81, %p82
      %p84 = scmp.ne.s32.totalorder %s73, %s76
      %p85 = scmp.eq.s32.totalorder %s30, 3
      %p86 = por %p84, %p85
      %p87 = scmp.ne.s32.totalorder %s76, %s77
      %p88 = scmp.eq.s32.totalorder %s30, 0
      %p89 = por %p87, %p88
      %p90 = scmp.ne.s32.totalorder %s76, %s77
      %p91 = scmp.eq.s32.totalorder %s31, 3
      %p92 = por %p90, %p91
      %p94 = scmp.ne.s32.totalorder %s77, %s93
      %p95 = scmp.eq.s32.totalorder %s31, 0
      %p96 = por %p94, %p95
      %s97 = ssub.s32 %s33, %s40
      %p98 = scmp.eq.s32.totalorder %s97, 0
      %s100 = sadd.s32 %s99, 1
      %s101 = scalar_select %p98, %s99, %s100
      %p104 = pneg %p98
      %p105 = scmp.eq.s32.totalorder %s25, 3
      %p106 = por %p104, %p105
      %p107 = scmp.ne.s32.totalorder %s99, %s102
      %p108 = scmp.eq.s32.totalorder %s25, 0
      %p109 = por %p107, %p108
      %p110 = scmp.ne.s32.totalorder %s99, %s102
      %p111 = scmp.eq.s32.totalorder %s30, 3
      %p112 = por %p110, %p111
      %p113 = scmp.ne.s32.totalorder %s102, %s103
      %p114 = scmp.eq.s32.totalorder %s30, 0
      %p115 = por %p113, %p114
      %p116 = scmp.ne.s32.totalorder %s102, %s103
      %p117 = scmp.eq.s32.totalorder %s31, 3
      %p118 = por %p116, %p117
      %p120 = scmp.ne.s32.totalorder %s103, %s119
      %p121 = scmp.eq.s32.totalorder %s31, 0
      %p122 = por %p120, %p121
      %s123 = ssub.s32 %s33, %s40
      %p124 = scmp.eq.s32.totalorder %s123, 0
      %s126 = sadd.s32 %s125, 1
      %s127 = scalar_select %p124, %s125, %s126
      %p130 = pneg %p124
      %p131 = scmp.eq.s32.totalorder %s25, 3
      %p132 = por %p130, %p131
      %p133 = scmp.ne.s32.totalorder %s125, %s128
      %p134 = scmp.eq.s32.totalorder %s25, 0
      %p135 = por %p133, %p134
      %p136 = scmp.ne.s32.totalorder %s125, %s128
      %p137 = scmp.eq.s32.totalorder %s30, 3
      %p138 = por %p136, %p137
      %p139 = scmp.ne.s32.totalorder %s128, %s129
      %p140 = scmp.eq.s32.totalorder %s30, 0
      %p141 = por %p139, %p140
      %p142 = scmp.ne.s32.totalorder %s128, %s129
      %p143 = scmp.eq.s32.totalorder %s31, 3
      %p144 = por %p142, %p143
      %p146 = scmp.ne.s32.totalorder %s129, %s145
      %p147 = scmp.eq.s32.totalorder %s31, 0
      %p148 = por %p146, %p147
      %s149 = ssub.s32 %s33, %s40
      %p150 = scmp.eq.s32.totalorder %s149, 0
      %s152 = sadd.s32 %s151, 1
      %s153 = scalar_select %p150, %s151, %s152
      %p156 = pneg %p150
      %p157 = scmp.eq.s32.totalorder %s25, 3
      %p158 = por %p156, %p157
      %p159 = scmp.ne.s32.totalorder %s151, %s154
      %p160 = scmp.eq.s32.totalorder %s25, 0
      %p161 = por %p159, %p160
      %p162 = scmp.ne.s32.totalorder %s151, %s154
      %p163 = scmp.eq.s32.totalorder %s30, 3
      %p164 = por %p162, %p163
      %p165 = scmp.ne.s32.totalorder %s154, %s155
      %p166 = scmp.eq.s32.totalorder %s30, 0
      %p167 = por %p165, %p166
      %p168 = scmp.ne.s32.totalorder %s154, %s155
      %p169 = scmp.eq.s32.totalorder %s31, 3
      %p170 = por %p168, %p169
      %p172 = scmp.ne.s32.totalorder %s155, %s171
      %p173 = scmp.eq.s32.totalorder %s31, 0
      %p174 = por %p172, %p173
      %s175 = ssub.s32 %s33, %s40
      %p176 = scmp.eq.s32.totalorder %s175, 0
      %s178 = sadd.s32 %s177, 1
      %s179 = scalar_select %p176, %s177, %s178
      %p182 = pneg %p176
      %p183 = scmp.eq.s32.totalorder %s25, 3
      %p184 = por %p182, %p183
      %p185 = scmp.ne.s32.totalorder %s177, %s180
      %p186 = scmp.eq.s32.totalorder %s25, 0
      %p187 = por %p185, %p186
      %p188 = scmp.ne.s32.totalorder %s177, %s180
      %p189 = scmp.eq.s32.totalorder %s30, 3
      %p190 = por %p188, %p189
      %p191 = scmp.ne.s32.totalorder %s180, %s181
      %p192 = scmp.eq.s32.totalorder %s30, 0
      %p193 = por %p191, %p192
      %p194 = scmp.ne.s32.totalorder %s180, %s181
      %p195 = scmp.eq.s32.totalorder %s31, 3
      %p196 = por %p194, %p195
      %p198 = scmp.ne.s32.totalorder %s181, %s197
      %p199 = scmp.eq.s32.totalorder %s31, 0
      %p200 = por %p198, %p199
      %s201 = ssub.s32 %s33, %s40
      %p202 = scmp.eq.s32.totalorder %s201, 0
      %s204 = sadd.s32 %s203, 1
      %s205 = scalar_select %p202, %s203, %s204
      %p208 = pneg %p202
      %p209 = scmp.eq.s32.totalorder %s25, 3
      %p210 = por %p208, %p209
      %p211 = scmp.ne.s32.totalorder %s203, %s206
      %p212 = scmp.eq.s32.totalorder %s25, 0
      %p213 = por %p211, %p212
      %p214 = scmp.ne.s32.totalorder %s203, %s206
      %p215 = scmp.eq.s32.totalorder %s30, 3
      %p216 = por %p214, %p215
      %p217 = scmp.ne.s32.totalorder %s206, %s207
      %p218 = scmp.eq.s32.totalorder %s30, 0
      %p219 = por %p217, %p218
      %p220 = scmp.ne.s32.totalorder %s206, %s207
      %p221 = scmp.eq.s32.totalorder %s31, 3
      %p222 = por %p220, %p221
      %p224 = scmp.ne.s32.totalorder %s207, %s223
      %p225 = scmp.eq.s32.totalorder %s31, 0
      %p226 = por %p224, %p225
      %s227 = ssub.s32 %s32, %s44
      %p228 = scmp.eq.s32.totalorder %s227, 0
      %s230 = sadd.s32 %s229, 1
      %s231 = scalar_select %p228, %s229, %s230
      %p234 = pneg %p228
      %p235 = scmp.eq.s32.totalorder %s25, 3
      %p236 = por %p234, %p235
      %p237 = scmp.ne.s32.totalorder %s229, %s232
      %p238 = scmp.eq.s32.totalorder %s25, 0
      %p239 = por %p237, %p238
      %p240 = scmp.ne.s32.totalorder %s229, %s232
      %p241 = scmp.eq.s32.totalorder %s30, 3
      %p242 = por %p240, %p241
      %p243 = scmp.ne.s32.totalorder %s232, %s233
      %p244 = scmp.eq.s32.totalorder %s30, 0
      %p245 = por %p243, %p244
      %p246 = scmp.ne.s32.totalorder %s232, %s233
      %p247 = scmp.eq.s32.totalorder %s31, 3
      %p248 = por %p246, %p247
      %p250 = scmp.ne.s32.totalorder %s233, %s249
      %p251 = scmp.eq.s32.totalorder %s31, 0
      %p252 = por %p250, %p251
      %p253 = scmp.le.s32.totalorder 1, %s25
      %p254 = scmp.lt.s32.totalorder %s25, 5
      %p255 = pnand %p253, %p254
      %p256 = pneg %p255
      // Predicated region
      $region9: #{transformer_stack.1} parent=5 // pred_check
        _
      $region10: #{transformer_stack.1} parent=5 // pred_check_branch
        %258 = sbr.rel (%p255) target = $region12
      $region11: #{transformer_stack.1} parent=5 // pred_region
        %s259 = ssub.s32 %s25, 1
      $region12: #{transformer_stack.1} parent=5 // pred_fallthru
        _
      %p260 = scmp.lt.s32.totalorder %s25, 4
      // Predicated region
      $region13: #{transformer_stack.1} parent=5 // pred_check
        %p261 = pneg %p260
      $region14: #{transformer_stack.1} parent=5 // pred_check_branch
        %263 = sbr.rel (%p261) target = $region16
      $region15: #{transformer_stack.1} parent=5 // pred_region
        // Predicated region
        $region17: #{transformer_stack.1} parent=15 // pred_check
          %p264 = pneg %p57
        $region18: #{transformer_stack.1} parent=15 // pred_check_branch
          %266 = sbr.rel (%p264) target = $region20
        $region19: #{transformer_stack.1} parent=15 // pred_region
          %s267 = sand.u32 %s47, 1
          %s268 = scalar_lea.sflag [#allocation4], %s267
          %s269 = sand.u32 %s47, 1
          %s270 = smul.addr %s269, 8
          %s271 = scalar_lea.vmem [#allocation3], %s270
          %273 = vsyncadd %s268, 0
          %s274 = smul.addr %s32, 8
          %s275 = scalar_lea.hbm %s0, %s274
          %s277 = sshll.u32 %s275, 4
          %s278 = int_to_ptr.hbm [resolvable:$true] %s277
          %s279 = sshll.u32 %s271, 4
          %s280 = int_to_ptr.vmem [resolvable:$true] %s279
          %282 = dma.hbm_to_vmem [thread:$0]  %s278, 128, %s280, %s268
        $region20: #{transformer_stack.1} parent=15 // pred_fallthru
          _
        // Predicated region
        $region21: #{transformer_stack.1} parent=15 // pred_check
          %p283 = pneg %p83
        $region22: #{transformer_stack.1} parent=15 // pred_check_branch
          %285 = sbr.rel (%p283) target = $region24
        $region23: #{transformer_stack.1} parent=15 // pred_region
          %s286 = sand.u32 %s25, 1
          %s287 = scalar_lea.sflag [#allocation7], %s286
          %s288 = sand.u32 %s73, 1
          %s289 = smul.addr %s288, 192
          %s290 = scalar_lea.vmem [#allocation6], %s289
          %292 = vsyncadd %s287, 0
          %s293 = smul.addr %s33, 48
          %s294 = smul.addr %s293, 4
          %s295 = scalar_lea.hbm %s1, %s294
          %s296 = sshll.u32 %s295, 4
          %s297 = int_to_ptr.hbm [resolvable:$true] %s296
          %s298 = sshll.u32 %s290, 4
          %s299 = int_to_ptr.vmem [resolvable:$true] %s298
          %304 = dma.hbm_to_vmem [thread:$0]  %s297, 3072, %s299, %s287, 192, 192, 12
        $region24: #{transformer_stack.1} parent=15 // pred_fallthru
          _
        // Predicated region
        $region25: #{transformer_stack.1} parent=15 // pred_check
          %p305 = pneg %p109
        $region26: #{transformer_stack.1} parent=15 // pred_check_branch
          %307 = sbr.rel (%p305) target = $region28
        $region27: #{transformer_stack.1} parent=15 // pred_region
          %s308 = sand.u32 %s25, 1
          %s309 = scalar_lea.sflag [#allocation7], %s308
          %s310 = sand.u32 %s99, 1
          %s311 = smul.addr %s310, 64
          %s312 = scalar_lea.vmem [#allocation8], %s311
          %314 = vsyncadd %s309, 0
          %s315 = smul.addr %s33, 16
          %s316 = smul.addr %s315, 4
          %s317 = scalar_lea.hbm %s2, %s316
          %s318 = sshll.u32 %s317, 4
          %s319 = int_to_ptr.hbm [resolvable:$true] %s318
          %s320 = sshll.u32 %s312, 4
          %s321 = int_to_ptr.vmem [resolvable:$true] %s320
          %326 = dma.hbm_to_vmem [thread:$0]  %s319, 1024, %s321, %s309, 64, 64, 4
        $region28: #{transformer_stack.1} parent=15 // pred_fallthru
          _
        // Predicated region
        $region29: #{transformer_stack.1} parent=15 // pred_check
          %p327 = pneg %p135
        $region30: #{transformer_stack.1} parent=15 // pred_check_branch
          %329 = sbr.rel (%p327) target = $region32
        $region31: #{transformer_stack.1} parent=15 // pred_region
          %s330 = sand.u32 %s25, 1
          %s331 = scalar_lea.sflag [#allocation10], %s330
          %s332 = sand.u32 %s125, 1
          %s333 = smul.addr %s332, 64
          %s334 = scalar_lea.vmem [#allocation9], %s333
          %336 = vsyncadd %s331, 0
          %s337 = smul.addr %s33, 16
          %s338 = smul.addr %s337, 4
          %s339 = scalar_lea.hbm %s3, %s338
          %s340 = sshll.u32 %s339, 4
          %s341 = int_to_ptr.hbm [resolvable:$true] %s340
          %s342 = sshll.u32 %s334, 4
          %s343 = int_to_ptr.vmem [resolvable:$true] %s342
          %348 = dma.hbm_to_vmem [thread:$0]  %s341, 1024, %s343, %s331, 64, 64, 4
        $region32: #{transformer_stack.1} parent=15 // pred_fallthru
          _
        // Predicated region
        $region33: #{transformer_stack.1} parent=15 // pred_check
          %p349 = pneg %p161
        $region34: #{transformer_stack.1} parent=15 // pred_check_branch
          %351 = sbr.rel (%p349) target = $region36
        $region35: #{transformer_stack.1} parent=15 // pred_region
          %p352 = scmp.lt.s32.totalorder %s33, 1
          %s353 = scalar_select %p352, %s33, 1
          %s354 = scalar_lea.vmem %s4, %s353
        $region36: #{transformer_stack.1} parent=15 // pred_fallthru
          _
        // Predicated region
        $region37: #{transformer_stack.1} parent=15 // pred_check
          %p355 = pneg %p187
        $region38: #{transformer_stack.1} parent=15 // pred_check_branch
          %357 = sbr.rel (%p355) target = $region40
        $region39: #{transformer_stack.1} parent=15 // pred_region
          %s358 = sand.u32 %s25, 1
          %s359 = scalar_lea.sflag [#allocation10], %s358
          %s360 = sand.u32 %s177, 1
          %s361 = smul.addr %s360, 64
          %s362 = scalar_lea.vmem [#allocation11], %s361
          %364 = vsyncadd %s359, 0
          %s365 = smul.addr %s33, 16
          %s366 = smul.addr %s365, 4
          %s367 = scalar_lea.hbm %s5, %s366
          %s368 = sshll.u32 %s367, 4
          %s369 = int_to_ptr.hbm [resolvable:$true] %s368
          %s370 = sshll.u32 %s362, 4
          %s371 = int_to_ptr.vmem [resolvable:$true] %s370
          %376 = dma.hbm_to_vmem [thread:$0]  %s369, 1024, %s371, %s359, 64, 64, 4
        $region40: #{transformer_stack.1} parent=15 // pred_fallthru
          _
        // Predicated region
        $region41: #{transformer_stack.1} parent=15 // pred_check
          %p377 = pneg %p213
        $region42: #{transformer_stack.1} parent=15 // pred_check_branch
          %379 = sbr.rel (%p377) target = $region44
        $region43: #{transformer_stack.1} parent=15 // pred_region
          %p380 = scmp.lt.s32.totalorder %s33, 1
          %s381 = scalar_select %p380, %s33, 1
          %s382 = scalar_lea.vmem %s6, %s381
        $region44: #{transformer_stack.1} parent=15 // pred_fallthru
          _
      $region16: #{transformer_stack.1} parent=5 // pred_fallthru
        _
      %p383 = scmp.le.s32.totalorder 1, %s25
      %p384 = scmp.lt.s32.totalorder %s25, 5
      %p385 = pnand %p383, %p384
      %p386 = pneg %p385
      // Predicated region
      $region45: #{transformer_stack.1} parent=5 // pred_check
        _
      $region46: #{transformer_stack.1} parent=5 // pred_check_branch
        %388 = sbr.rel (%p385) target = $region48
      $region47: #{transformer_stack.1} parent=5 // pred_region
        %s389 = ssub.s32 %s25, 1
        %s390 = sand.u32 %s50, 1
        %s391 = scalar_lea.sflag [#allocation4], %s390
        %s392 = sand.u32 %s50, 1
        %s393 = smul.addr %s392, 8
        %s394 = scalar_lea.vmem [#allocation3], %s393
        // Predicated region
        $region49: #{transformer_stack.1} parent=47 // pred_check
          %p395 = pneg %p63
        $region50: #{transformer_stack.1} parent=47 // pred_check_branch
          %397 = sbr.rel (%p395) target = $region52
        $region51: #{transformer_stack.1} parent=47 // pred_region
          %399 = dma.done %s391, 128
        $region52: #{transformer_stack.1} parent=47 // pred_fallthru
          _
        %s400 = sand.u32 %s30, 1
        %s401 = scalar_lea.sflag [#allocation7], %s400
        %s402 = sand.u32 %s76, 1
        %s403 = smul.addr %s402, 192
        %s404 = scalar_lea.vmem [#allocation6], %s403
        // Predicated region
        $region53: #{transformer_stack.1} parent=47 // pred_check
          %p405 = pneg %p89
        $region54: #{transformer_stack.1} parent=47 // pred_check_branch
          %407 = sbr.rel (%p405) target = $region56
        $region55: #{transformer_stack.1} parent=47 // pred_region
          %409 = dma.done %s401, 3072
        $region56: #{transformer_stack.1} parent=47 // pred_fallthru
          _
        %s410 = sand.u32 %s30, 1
        %s411 = scalar_lea.sflag [#allocation7], %s410
        %s412 = sand.u32 %s102, 1
        %s413 = smul.addr %s412, 64
        %s414 = scalar_lea.vmem [#allocation8], %s413
        // Predicated region
        $region57: #{transformer_stack.1} parent=47 // pred_check
          %p415 = pneg %p115
        $region58: #{transformer_stack.1} parent=47 // pred_check_branch
          %417 = sbr.rel (%p415) target = $region60
        $region59: #{transformer_stack.1} parent=47 // pred_region
          %419 = dma.done %s411, 1024
        $region60: #{transformer_stack.1} parent=47 // pred_fallthru
          _
        %s420 = sand.u32 %s30, 1
        %s421 = scalar_lea.sflag [#allocation10], %s420
        %s422 = sand.u32 %s128, 1
        %s423 = smul.addr %s422, 64
        %s424 = scalar_lea.vmem [#allocation9], %s423
        // Predicated region
        $region61: #{transformer_stack.1} parent=47 // pred_check
          %p425 = pneg %p141
        $region62: #{transformer_stack.1} parent=47 // pred_check_branch
          %427 = sbr.rel (%p425) target = $region64
        $region63: #{transformer_stack.1} parent=47 // pred_region
          %429 = dma.done %s421, 1024
        $region64: #{transformer_stack.1} parent=47 // pred_fallthru
          _
        %s430 = sand.u32 %s30, 1
        %s431 = scalar_lea.sflag [#allocation10], %s430
        %s432 = sand.u32 %s180, 1
        %s433 = smul.addr %s432, 64
        %s434 = scalar_lea.vmem [#allocation11], %s433
        // Predicated region
        $region65: #{transformer_stack.1} parent=47 // pred_check
          %p435 = pneg %p193
        $region66: #{transformer_stack.1} parent=47 // pred_check_branch
          %437 = sbr.rel (%p435) target = $region68
        $region67: #{transformer_stack.1} parent=47 // pred_region
          %439 = dma.done %s431, 1024
        $region68: #{transformer_stack.1} parent=47 // pred_fallthru
          _
        %s440 = sand.u32 %s50, 1
        %s441 = scalar_lea.sflag [#allocation4], %s440
        %s442 = sand.u32 %s50, 1
        %s443 = smul.addr %s442, 8
        %s444 = scalar_lea.vmem [#allocation3], %s443
        %p445 = pneg %p63
        %p446 = pneg %p60
        %s447 = sand.u32 %s30, 1
        %s448 = scalar_lea.sflag [#allocation7], %s447
        %s449 = sand.u32 %s76, 1
        %s450 = smul.addr %s449, 192
        %s451 = scalar_lea.vmem [#allocation6], %s450
        %p452 = pneg %p89
        %p453 = pneg %p86
        %s454 = sand.u32 %s30, 1
        %s455 = scalar_lea.sflag [#allocation7], %s454
        %s456 = sand.u32 %s102, 1
        %s457 = smul.addr %s456, 64
        %s458 = scalar_lea.vmem [#allocation8], %s457
        %p459 = pneg %p115
        %p460 = pneg %p112
        %s461 = sand.u32 %s30, 1
        %s462 = scalar_lea.sflag [#allocation10], %s461
        %s463 = sand.u32 %s128, 1
        %s464 = smul.addr %s463, 64
        %s465 = scalar_lea.vmem [#allocation9], %s464
        %p466 = pneg %p141
        %p467 = pneg %p138
        %p468 = scmp.lt.s32.totalorder %s35, 1
        %s469 = scalar_select %p468, %s35, 1
        %s470 = scalar_lea.vmem %s4, %s469
        %p471 = pneg %p167
        %p472 = pneg %p164
        %s473 = sand.u32 %s30, 1
        %s474 = scalar_lea.sflag [#allocation10], %s473
        %s475 = sand.u32 %s180, 1
        %s476 = smul.addr %s475, 64
        %s477 = scalar_lea.vmem [#allocation11], %s476
        %p478 = pneg %p193
        %p479 = pneg %p190
        %p480 = scmp.lt.s32.totalorder %s35, 1
        %s481 = scalar_select %p480, %s35, 1
        %s482 = scalar_lea.vmem %s6, %s481
        %p483 = pneg %p219
        %p484 = pneg %p216
        %p485 = pneg %p245
        %p486 = pneg %p242
        %s487 = sand.u32 %s232, 1
        %s488 = scalar_lea.sflag [#allocation5], %s487
        %s489 = sand.u32 %s232, 1
        %s490 = smul.addr %s489, 8
        %s491 = scalar_lea.vmem [#allocation12], %s490
        %p492 = scmp.lt.s32.totalorder %s35, 1
        %s493 = scalar_select %p492, %s35, 1
        %s494 = scalar_lea.vmem %s4, %s493
        %p495 = scmp.lt.s32.totalorder %s35, 1
        %s496 = scalar_select %p495, %s35, 1
        %s497 = scalar_lea.vmem %s6, %s496
        %p499 = scmp.eq.s32.totalorder %s35, 0
        // Predicated region
        $region69: #{transformer_stack.1} parent=47 // pred_check
          %p500 = pneg %p499
        $region70: #{transformer_stack.1} parent=47 // pred_check_branch
          %502 = sbr.rel (%p500) target = $region72
        $region71: #{transformer_stack.1} parent=47 // pred_region
          %503 = vst [vmem:[#allocation2] sm:$0xff] 0.0
          %v504 = vld [vmem:[%s394] sm:$0xff]
          %vm505 = vcmask 261120
          %506 = vst.msk [vmem:[#allocation2] sm:$0xff] %vm505, %v504
        $region72: #{transformer_stack.1} parent=47 // pred_fallthru
          _
        %v507 = vld [vmem:[#allocation2] sm:$0xff]
        %v508 = vld [vmem:[%s404] sm:$0xff]
        %v509 = vld [vmem:[%s404 + $0x8] sm:$0xf]
        %v510 = vld [vmem:[%s404 + $0xc] sm:$0xff]
        %v511 = vld [vmem:[%s404 + $0x14] sm:$0xf]
        %v512 = vld [vmem:[%s404 + $0x18] sm:$0xff]
        %v513 = vld [vmem:[%s404 + $0x20] sm:$0xf]
        %v514 = vld [vmem:[%s404 + $0x24] sm:$0xff]
        %v515 = vld [vmem:[%s404 + $0x2c] sm:$0xf]
        %v516 = vld [vmem:[%s404 + $0x30] sm:$0xff]
        %v517 = vld [vmem:[%s404 + $0x38] sm:$0xf]
        %v518 = vld [vmem:[%s404 + $0x3c] sm:$0xff]
        %v519 = vld [vmem:[%s404 + $0x44] sm:$0xf]
        %v520 = vld [vmem:[%s404 + $0x48] sm:$0xff]
        %v521 = vld [vmem:[%s404 + $0x50] sm:$0xf]
        %v522 = vld [vmem:[%s404 + $0x54] sm:$0xff]
        %v523 = vld [vmem:[%s404 + $0x5c] sm:$0xf]
        %v524 = vld [vmem:[%s404 + $0x60] sm:$0xff]
        %v525 = vld [vmem:[%s404 + $0x68] sm:$0xf]
        %v526 = vld [vmem:[%s404 + $0x6c] sm:$0xff]
        %v527 = vld [vmem:[%s404 + $0x74] sm:$0xf]
        %v528 = vld [vmem:[%s404 + $0x78] sm:$0xff]
        %v529 = vld [vmem:[%s404 + $0x80] sm:$0xf]
        %v530 = vld [vmem:[%s404 + $0x84] sm:$0xff]
        %v531 = vld [vmem:[%s404 + $0x8c] sm:$0xf]
        %v532 = vld [vmem:[%s404 + $0x90] sm:$0xff]
        %v533 = vld [vmem:[%s404 + $0x98] sm:$0xf]
        %v534 = vld [vmem:[%s404 + $0x9c] sm:$0xff]
        %v535 = vld [vmem:[%s404 + $0xa4] sm:$0xf]
        %v536 = vld [vmem:[%s404 + $0xa8] sm:$0xff]
        %v537 = vld [vmem:[%s404 + $0xb0] sm:$0xf]
        %v538 = vld [vmem:[%s404 + $0xb4] sm:$0xff]
        %v539 = vld [vmem:[%s404 + $0xbc] sm:$0xf]
        %v540 = vpack.c.bf16 %v507, %v507
        %v573 = vunpack.c.l.b16 %v508
        %v574 = vunpack.c.h.b16 %v508
        %v575 = vunpack.c.l.b16 %v509
        %v576 = vunpack.c.l.b16 %v510
        %v577 = vunpack.c.h.b16 %v510
        %v578 = vunpack.c.l.b16 %v511
        %v579 = vunpack.c.l.b16 %v512
        %v580 = vunpack.c.h.b16 %v512
        %v581 = vunpack.c.l.b16 %v513
        %v582 = vunpack.c.l.b16 %v514
        %v583 = vunpack.c.h.b16 %v514
        %v584 = vunpack.c.l.b16 %v515
        %v585 = vunpack.c.l.b16 %v516
        %v586 = vunpack.c.h.b16 %v516
        %v587 = vunpack.c.l.b16 %v517
        %v588 = vunpack.c.l.b16 %v518
        %v589 = vunpack.c.h.b16 %v518
        %v590 = vunpack.c.l.b16 %v519
        %v591 = vunpack.c.l.b16 %v520
        %v592 = vunpack.c.h.b16 %v520
        %v593 = vunpack.c.l.b16 %v521
        %v594 = vunpack.c.l.b16 %v522
        %v595 = vunpack.c.h.b16 %v522
        %v596 = vunpack.c.l.b16 %v523
        %v597 = vunpack.c.l.b16 %v524
        %v598 = vunpack.c.h.b16 %v524
        %v599 = vunpack.c.l.b16 %v525
        %v600 = vunpack.c.l.b16 %v526
        %v601 = vunpack.c.h.b16 %v526
        %v602 = vunpack.c.l.b16 %v527
        %v603 = vunpack.c.l.b16 %v528
        %v604 = vunpack.c.h.b16 %v528
        %v605 = vunpack.c.l.b16 %v529
        %v606 = vunpack.c.l.b16 %v530
        %v607 = vunpack.c.h.b16 %v530
        %v608 = vunpack.c.l.b16 %v531
        %v609 = vunpack.c.l.b16 %v532
        %v610 = vunpack.c.h.b16 %v532
        %v611 = vunpack.c.l.b16 %v533
        %v612 = vunpack.c.l.b16 %v534
        %v613 = vunpack.c.h.b16 %v534
        %v614 = vunpack.c.l.b16 %v535
        %v615 = vunpack.c.l.b16 %v536
        %v616 = vunpack.c.h.b16 %v536
        %v617 = vunpack.c.l.b16 %v537
        %v618 = vunpack.c.l.b16 %v538
        %v619 = vunpack.c.h.b16 %v538
        %v620 = vunpack.c.l.b16 %v539
        %v621 = vpack.c.b16 %v576, %v573
        %v622 = vpack.c.b16 %v577, %v574
        %v623 = vpack.c.b16 %v578, %v575
        %v624 = vpack.c.b16 %v582, %v579
        %v625 = vpack.c.b16 %v583, %v580
        %v626 = vpack.c.b16 %v584, %v581
        %v627 = vpack.c.b16 %v588, %v585
        %v628 = vpack.c.b16 %v589, %v586
        %v629 = vpack.c.b16 %v590, %v587
        %v630 = vpack.c.b16 %v594, %v591
        %v631 = vpack.c.b16 %v595, %v592
        %v632 = vpack.c.b16 %v596, %v593
        %v633 = vpack.c.b16 %v600, %v597
        %v634 = vpack.c.b16 %v601, %v598
        %v635 = vpack.c.b16 %v602, %v599
        %v636 = vpack.c.b16 %v606, %v603
        %v637 = vpack.c.b16 %v607, %v604
        %v638 = vpack.c.b16 %v608, %v605
        %v639 = vpack.c.b16 %v612, %v609
        %v640 = vpack.c.b16 %v613, %v610
        %v641 = vpack.c.b16 %v614, %v611
        %v642 = vpack.c.b16 %v618, %v615
        %v643 = vpack.c.b16 %v619, %v616
        %v644 = vpack.c.b16 %v620, %v617
        %669 = vmatpush.bf16.msra.mxu0 %v642
        %670 = vmatpush.bf16.msra.mxu0 %v639
        %671 = vmatpush.bf16.msra.mxu0 %v636
        %672 = vmatpush.bf16.msra.mxu0 %v633
        %673 = vmatpush.bf16.msra.mxu0 %v630
        %674 = vmatpush.bf16.msra.mxu0 %v627
        %675 = vmatpush.bf16.msra.mxu0 %v624
        %676 = vmatpush.bf16.msra.mxu0 %v621
        %677 = vmatmul.bf16.gmra.mxu0 %v540
        %v678 = vpop.f32.mrf.mxu0
        %v679 = vadd.f32 0.0, %v678
        %v680 = vpop.f32.mrf.mxu0
        %681 = vdwg.mxu0
        %682 = vmatpush.bf16.msra.mxu0 %v643
        %683 = vmatpush.bf16.msra.mxu0 %v640
        %684 = vmatpush.bf16.msra.mxu0 %v637
        %685 = vmatpush.bf16.msra.mxu0 %v634
        %686 = vmatpush.bf16.msra.mxu0 %v631
        %687 = vmatpush.bf16.msra.mxu0 %v628
        %688 = vmatpush.bf16.msra.mxu0 %v625
        %689 = vmatpush.bf16.msra.mxu0 %v622
        %690 = vmatmul.bf16.gmra.mxu0 %v540
        %v691 = vpop.f32.mrf.mxu0
        %v692 = vadd.f32 0.0, %v691
        %v693 = vpop.f32.mrf.mxu0
        %694 = vdwg.mxu0
        %695 = vmatpush.bf16.msra.mxu0 %v644
        %696 = vmatpush.bf16.msra.mxu0 %v641
        %697 = vmatpush.bf16.msra.mxu0 %v638
        %698 = vmatpush.bf16.msra.mxu0 %v635
        %699 = vmatpush.bf16.msra.mxu0 %v632
        %700 = vmatpush.bf16.msra.mxu0 %v629
        %701 = vmatpush.bf16.msra.mxu0 %v626
        %702 = vmatpush.bf16.msra.mxu0 %v623
        %703 = vmatmul.bf16.gmra.mxu0 %v540
        %v704 = vpop.f32.mrf.mxu0
        %v705 = vadd.f32 0.0, %v704
        %v706 = vpop.f32.mrf.mxu0
        %707 = vdwg.mxu0
        %v708 = vpack.c.bf16 %v679, %v679
        %v709 = vpack.c.bf16 %v692, %v692
        %710 = vmatpush.bf16.xpose.msra.mxu0 0
        %711 = vmatpush.bf16.xpose.msra.mxu0 0
        %712 = vmatpush.bf16.xpose.msra.mxu0 0
        %713 = vmatpush.bf16.xpose.msra.mxu0 0
        %714 = vmatpush.bf16.xpose.msra.mxu0 0
        %715 = vmatpush.bf16.xpose.msra.mxu0 0
        %716 = vmatpush.bf16.xpose.msra.mxu0 0
        %717 = vmatpush.bf16.xpose.msra.mxu0 %v709
        %718 = vmatmul.bf16.gmra.mxu0 %v708
        %v719 = vpop.f32.mrf.mxu0
        %v720 = vadd.f32 0.0, %v719
        %v721 = vpop.f32.mrf.mxu0
        %722 = vdwg.mxu0
        %vm723 = vcmask 64512
        %v724 = vsel %vm723, %v720, -inf
        %725 = vmax.xlane.f32.xlu0 %v724
        %v726 = vpop.xlane.xlu0 %725
        %v727 = vsub.f32 %v720, %v726
        %v728 = vmul.f32 %v727, 1.442695
        %v729 = vpow.pop %v728
        %v730 = vsel %vm723, %v729, 0.0
        %731 = vadd.xlane.f32.xlu0 %v730
        %v732 = vpop.xlane.xlu0 %731
        %v733 = vrcp.pop %v732
        %v734 = vmul.f32 %v732, %v733
        %v735 = vsub.f32 1.0, %v734
        %v736 = vmul.f32 %v733, %v735
        %v737 = vadd.f32 %v733, %v736
        %vm738 = vweird.f32 %v732
        %vm739 = vweird.f32 %v733
        %vm740 = vmor %vm738, %vm739
        %v741 = vsel %vm740, %v733, %v737
        %v742 = vand.u32 2147483647, %v732
        %vm743 = vcmp.eq.f32.partialorder %v742, 8.507059e+37
        %v744 = vand.u32 %v732, 2147483648
        %v745 = vor.u32 1.1754944e-38, %v744
        %v746 = vsel %vm743, %v745, %v741
        %v747 = vmul.f32 %v729, %v746
        %v748 = vpack.c.bf16 %v747, %v747
        %v749 = vpack.c.bf16 %v705, %v705
        %v751 = vsel %vm723, %v748, 0
        %vm753 = vcmask 1043456
        %v755 = vsel %vm753, %v749, 0
        %757 = vmatpush.bf16.msra.mxu0 0
        %758 = vmatpush.bf16.msra.mxu0 0
        %759 = vmatpush.bf16.msra.mxu0 0
        %760 = vmatpush.bf16.msra.mxu0 0
        %761 = vmatpush.bf16.msra.mxu0 0
        %762 = vmatpush.bf16.msra.mxu0 0
        %763 = vmatpush.bf16.msra.mxu0 0
        %764 = vmatpush.bf16.msra.mxu0 %v755
        %765 = vmatmul.bf16.gmra.mxu0 %v751
        %v766 = vpop.f32.mrf.mxu0
        %v767 = vadd.f32 0.0, %v766
        %v768 = vpop.f32.mrf.mxu0
        %769 = vdwg.mxu0
        %v770 = vld [vmem:[%s414] sm:$0xf]
        %v771 = vld [vmem:[%s414 + $0x4] sm:$0xf]
        %v772 = vld [vmem:[%s414 + $0x8] sm:$0xf]
        %v773 = vld [vmem:[%s414 + $0xc] sm:$0xf]
        %v774 = vld [vmem:[%s414 + $0x10] sm:$0xf]
        %v775 = vld [vmem:[%s414 + $0x14] sm:$0xf]
        %v776 = vld [vmem:[%s414 + $0x18] sm:$0xf]
        %v777 = vld [vmem:[%s414 + $0x1c] sm:$0xf]
        %v778 = vld [vmem:[%s414 + $0x20] sm:$0xf]
        %v779 = vld [vmem:[%s414 + $0x24] sm:$0xf]
        %v780 = vld [vmem:[%s414 + $0x28] sm:$0xf]
        %v781 = vld [vmem:[%s414 + $0x2c] sm:$0xf]
        %v782 = vld [vmem:[%s414 + $0x30] sm:$0xf]
        %v783 = vld [vmem:[%s414 + $0x34] sm:$0xf]
        %v784 = vld [vmem:[%s414 + $0x38] sm:$0xf]
        %v785 = vld [vmem:[%s414 + $0x3c] sm:$0xf]
        %v786 = vpack.c.bf16 %v767, %v767
        %v803 = vunpack.c.l.b16 %v770
        %v804 = vunpack.c.l.b16 %v771
        %v805 = vunpack.c.l.b16 %v772
        %v806 = vunpack.c.l.b16 %v773
        %v807 = vunpack.c.l.b16 %v774
        %v808 = vunpack.c.l.b16 %v775
        %v809 = vunpack.c.l.b16 %v776
        %v810 = vunpack.c.l.b16 %v777
        %v811 = vunpack.c.l.b16 %v778
        %v812 = vunpack.c.l.b16 %v779
        %v813 = vunpack.c.l.b16 %v780
        %v814 = vunpack.c.l.b16 %v781
        %v815 = vunpack.c.l.b16 %v782
        %v816 = vunpack.c.l.b16 %v783
        %v817 = vunpack.c.l.b16 %v784
        %v818 = vunpack.c.l.b16 %v785
        %v819 = vpack.c.b16 %v804, %v803
        %v820 = vpack.c.b16 %v806, %v805
        %v821 = vpack.c.b16 %v808, %v807
        %v822 = vpack.c.b16 %v810, %v809
        %v823 = vpack.c.b16 %v812, %v811
        %v824 = vpack.c.b16 %v814, %v813
        %v825 = vpack.c.b16 %v816, %v815
        %v826 = vpack.c.b16 %v818, %v817
        %835 = vmatpush.bf16.msra.mxu0 %v826
        %836 = vmatpush.bf16.msra.mxu0 %v825
        %837 = vmatpush.bf16.msra.mxu0 %v824
        %838 = vmatpush.bf16.msra.mxu0 %v823
        %839 = vmatpush.bf16.msra.mxu0 %v822
        %840 = vmatpush.bf16.msra.mxu0 %v821
        %841 = vmatpush.bf16.msra.mxu0 %v820
        %842 = vmatpush.bf16.msra.mxu0 %v819
        %843 = vmatmul.bf16.gmra.mxu0 %v786
        %v844 = vpop.f32.mrf.mxu0
        %v845 = vadd.f32 0.0, %v844
        %v846 = vpop.f32.mrf.mxu0
        %847 = vdwg.mxu0
        %v848 = vadd.f32 %v507, %v845
        %v849 = vld [vmem:[%s424] sm:$0xf]
        %v850 = vld [vmem:[%s424 + $0x4] sm:$0xf]
        %v851 = vld [vmem:[%s424 + $0x8] sm:$0xf]
        %v852 = vld [vmem:[%s424 + $0xc] sm:$0xf]
        %v853 = vld [vmem:[%s424 + $0x10] sm:$0xf]
        %v854 = vld [vmem:[%s424 + $0x14] sm:$0xf]
        %v855 = vld [vmem:[%s424 + $0x18] sm:$0xf]
        %v856 = vld [vmem:[%s424 + $0x1c] sm:$0xf]
        %v857 = vld [vmem:[%s424 + $0x20] sm:$0xf]
        %v858 = vld [vmem:[%s424 + $0x24] sm:$0xf]
        %v859 = vld [vmem:[%s424 + $0x28] sm:$0xf]
        %v860 = vld [vmem:[%s424 + $0x2c] sm:$0xf]
        %v861 = vld [vmem:[%s424 + $0x30] sm:$0xf]
        %v862 = vld [vmem:[%s424 + $0x34] sm:$0xf]
        %v863 = vld [vmem:[%s424 + $0x38] sm:$0xf]
        %v864 = vld [vmem:[%s424 + $0x3c] sm:$0xf]
        %v865 = vpack.c.bf16 %v848, %v848
        %v866 = vld [vmem:[%s494] sm:$0x1]
        %v868 = vperm.slane %v866, 0
        %v886 = vunpack.c.l.b16 %v849
        %v887 = vunpack.c.l.b16 %v850
        %v888 = vunpack.c.l.b16 %v851
        %v889 = vunpack.c.l.b16 %v852
        %v890 = vunpack.c.l.b16 %v853
        %v891 = vunpack.c.l.b16 %v854
        %v892 = vunpack.c.l.b16 %v855
        %v893 = vunpack.c.l.b16 %v856
        %v894 = vunpack.c.l.b16 %v857
        %v895 = vunpack.c.l.b16 %v858
        %v896 = vunpack.c.l.b16 %v859
        %v897 = vunpack.c.l.b16 %v860
        %v898 = vunpack.c.l.b16 %v861
        %v899 = vunpack.c.l.b16 %v862
        %v900 = vunpack.c.l.b16 %v863
        %v901 = vunpack.c.l.b16 %v864
        %v902 = vpack.c.b16 %v887, %v886
        %v903 = vpack.c.b16 %v889, %v888
        %v904 = vpack.c.b16 %v891, %v890
        %v905 = vpack.c.b16 %v893, %v892
        %v906 = vpack.c.b16 %v895, %v894
        %v907 = vpack.c.b16 %v897, %v896
        %v908 = vpack.c.b16 %v899, %v898
        %v909 = vpack.c.b16 %v901, %v900
        %918 = vmatpush.bf16.msra.mxu0 %v909
        %919 = vmatpush.bf16.msra.mxu0 %v908
        %920 = vmatpush.bf16.msra.mxu0 %v907
        %921 = vmatpush.bf16.msra.mxu0 %v906
        %922 = vmatpush.bf16.msra.mxu0 %v905
        %923 = vmatpush.bf16.msra.mxu0 %v904
        %924 = vmatpush.bf16.msra.mxu0 %v903
        %925 = vmatpush.bf16.msra.mxu0 %v902
        %926 = vmatmul.bf16.gmra.mxu0 %v865
        %v927 = vpop.f32.mrf.mxu0
        %v928 = vadd.f32 %v868, %v927
        %v929 = vpop.f32.mrf.mxu0
        %930 = vdwg.mxu0
        %v931 = vmul.f32 %v928, %v928
        %v932 = vmul.f32 %v928, %v931
        %v933 = vmul.f32 %v932, 0.044715
        %v934 = vadd.f32 %v928, %v933
        %v935 = vmul.f32 %v934, 0.7978846
        %v936 = vtanh.pop %v935
        %v937 = vadd.f32 %v936, 1.0
        %v938 = vmul.f32 %v937, 0.5
        %v939 = vmul.f32 %v928, %v938
        %v940 = vld [vmem:[%s434] sm:$0xf]
        %v941 = vld [vmem:[%s434 + $0x4] sm:$0xf]
        %v942 = vld [vmem:[%s434 + $0x8] sm:$0xf]
        %v943 = vld [vmem:[%s434 + $0xc] sm:$0xf]
        %v944 = vld [vmem:[%s434 + $0x10] sm:$0xf]
        %v945 = vld [vmem:[%s434 + $0x14] sm:$0xf]
        %v946 = vld [vmem:[%s434 + $0x18] sm:$0xf]
        %v947 = vld [vmem:[%s434 + $0x1c] sm:$0xf]
        %v948 = vld [vmem:[%s434 + $0x20] sm:$0xf]
        %v949 = vld [vmem:[%s434 + $0x24] sm:$0xf]
        %v950 = vld [vmem:[%s434 + $0x28] sm:$0xf]
        %v951 = vld [vmem:[%s434 + $0x2c] sm:$0xf]
        %v952 = vld [vmem:[%s434 + $0x30] sm:$0xf]
        %v953 = vld [vmem:[%s434 + $0x34] sm:$0xf]
        %v954 = vld [vmem:[%s434 + $0x38] sm:$0xf]
        %v955 = vld [vmem:[%s434 + $0x3c] sm:$0xf]
        %v956 = vpack.c.bf16 %v939, %v939
        %v973 = vunpack.c.l.b16 %v940
        %v974 = vunpack.c.l.b16 %v941
        %v975 = vunpack.c.l.b16 %v942
        %v976 = vunpack.c.l.b16 %v943
        %v977 = vunpack.c.l.b16 %v944
        %v978 = vunpack.c.l.b16 %v945
        %v979 = vunpack.c.l.b16 %v946
        %v980 = vunpack.c.l.b16 %v947
        %v981 = vunpack.c.l.b16 %v948
        %v982 = vunpack.c.l.b16 %v949
        %v983 = vunpack.c.l.b16 %v950
        %v984 = vunpack.c.l.b16 %v951
        %v985 = vunpack.c.l.b16 %v952
        %v986 = vunpack.c.l.b16 %v953
        %v987 = vunpack.c.l.b16 %v954
        %v988 = vunpack.c.l.b16 %v955
        %v989 = vpack.c.b16 %v974, %v973
        %v990 = vpack.c.b16 %v976, %v975
        %v991 = vpack.c.b16 %v978, %v977
        %v992 = vpack.c.b16 %v980, %v979
        %v993 = vpack.c.b16 %v982, %v981
        %v994 = vpack.c.b16 %v984, %v983
        %v995 = vpack.c.b16 %v986, %v985
        %v996 = vpack.c.b16 %v988, %v987
        %1005 = vmatpush.bf16.msra.mxu0 %v996
        %1006 = vmatpush.bf16.msra.mxu0 %v995
        %1007 = vmatpush.bf16.msra.mxu0 %v994
        %1008 = vmatpush.bf16.msra.mxu0 %v993
        %1009 = vmatpush.bf16.msra.mxu0 %v992
        %1010 = vmatpush.bf16.msra.mxu0 %v991
        %1011 = vmatpush.bf16.msra.mxu0 %v990
        %1012 = vmatpush.bf16.msra.mxu0 %v989
        %1013 = vmatmul.bf16.gmra.mxu0 %v956
        %v1014 = vpop.f32.mrf.mxu0
        %v1015 = vadd.f32 0.0, %v1014
        %v1016 = vpop.f32.mrf.mxu0
        %1017 = vdwg.mxu0
        %v1018 = vadd.f32 %v848, %v1015
        %v1019 = vld [vmem:[%s497] sm:$0x1]
        %v1021 = vperm.slane %v1019, 0
        %v1023 = vadd.f32 %v1018, %v1021
        %1024 = vst [vmem:[#allocation2] sm:$0xff] %v1023
        %p1025 = scmp.eq.s32.totalorder %s35, 1
        // Predicated region
        $region73: #{transformer_stack.1} parent=47 // pred_check
          %p1026 = pneg %p1025
        $region74: #{transformer_stack.1} parent=47 // pred_check_branch
          %1028 = sbr.rel (%p1026) target = $region76
        $region75: #{transformer_stack.1} parent=47 // pred_region
          %vm1029 = vcmask 261120
          %1030 = vst.msk [vmem:[%s491] sm:$0xff] %vm1029, %v1023
        $region76: #{transformer_stack.1} parent=47 // pred_fallthru
          _
        %s1031 = sand.u32 %s232, 1
        %s1032 = scalar_lea.sflag [#allocation5], %s1031
        %s1033 = sand.u32 %s232, 1
        %s1034 = smul.addr %s1033, 8
        %s1035 = scalar_lea.vmem [#allocation12], %s1034
        // Predicated region
        $region77: #{transformer_stack.1} parent=47 // pred_check
          %p1036 = pneg %p242
        $region78: #{transformer_stack.1} parent=47 // pred_check_branch
          %1038 = sbr.rel (%p1036) target = $region80
        $region79: #{transformer_stack.1} parent=47 // pred_region
          %1040 = vsyncadd %s1032, 0
          %s1041 = smul.addr %s34, 8
          %s1042 = scalar_lea.hbm %s7, %s1041
          %s1044 = sshll.u32 %s1035, 4
          %s1045 = int_to_ptr.vmem [resolvable:$true] %s1044
          %s1046 = sshll.u32 %s1042, 4
          %s1047 = int_to_ptr.hbm [resolvable:$true] %s1046
          %1049 = dma.vmem_to_hbm [thread:$0]  %s1045, 128, %s1047, %s1032
        $region80: #{transformer_stack.1} parent=47 // pred_fallthru
          _
      $region48: #{transformer_stack.1} parent=5 // pred_fallthru
        _
      %p1050 = scmp.le.s32.totalorder 2, %s25
      // Predicated region
      $region81: #{transformer_stack.1} parent=5 // pred_check
        %p1051 = pneg %p1050
      $region82: #{transformer_stack.1} parent=5 // pred_check_branch
        %1053 = sbr.rel (%p1051) target = $region84
      $region83: #{transformer_stack.1} parent=5 // pred_region
        %s1054 = ssub.s32 %s25, 2
        // Predicated region
        $region85: #{transformer_stack.1} parent=83 // pred_check
          %p1055 = pneg %p248
        $region86: #{transformer_stack.1} parent=83 // pred_check_branch
          %1057 = sbr.rel (%p1055) target = $region88
        $region87: #{transformer_stack.1} parent=83 // pred_region
          %s1058 = sand.u32 %s233, 1
          %s1059 = scalar_lea.sflag [#allocation5], %s1058
          %s1060 = sand.u32 %s233, 1
          %s1061 = smul.addr %s1060, 8
          %s1062 = scalar_lea.vmem [#allocation12], %s1061
          %1064 = dma.done %s1059, 128
        $region88: #{transformer_stack.1} parent=83 // pred_fallthru
          _
      $region84: #{transformer_stack.1} parent=5 // pred_fallthru
        _
    $region6: #{transformer_stack.1} parent=1 // loop_footer
      %s29 = sadd.s32 1, %s25
    $region7: #{transformer_stack.1} parent=1 // loop_footer_branch
      %24 = sbr.rel target = $region3
    $region8: #{transformer_stack.1} parent=1 // loop_exit
      _
    %1065 = vsyncpa [#allocation4], 1
    %s1066 = scalar_lea.sflag [#allocation4], 1
    %1067 = vsyncpa %s1066, 1
    %1068 = vsyncpa [#allocation7], 1
    %s1069 = scalar_lea.sflag [#allocation7], 1
    %1070 = vsyncpa %s1069, 1
    %1071 = vsyncpa [#allocation10], 1
    %s1072 = scalar_lea.sflag [#allocation10], 1
    %1073 = vsyncpa %s1072, 1
    %1074 = vsyncpa [#allocation5], 1
    %s1075 = scalar_lea.sflag [#allocation5], 1
    %1076 = vsyncpa %s1075, 1

</llo_original>
